<compile_context>
chip_gen: v7x
topology: tpu7x:2x2x1
jax: 0.10.0
libtpu: 0.0.40
codegen_flags: <defaults>
</compile_context>

<pallas_src>
import math

import jax
import jax.numpy as jnp
from jax.experimental import pallas as pl
from jax.experimental.pallas import tpu as pltpu


_TARGET_TILE_ROWS = 16384      # middle of the recommended 8K-32K row band
_AUTO_BF16_MIN_BATCH = 4096    # HBM-bound regime -> bf16 I/O by default


def _round_up(x, m):
    return ((x + m - 1) // m) * m


def _pick_pack(in_dim, out_dim):
    """Batch-lane packing factor p (p batch rows share one packed row).

    Prefer p that makes the packed output exactly 128 lanes wide (unmasked
    full-width stores); otherwise make the packed input lane-dense; else 1.
    """
    if 0 < out_dim <= 128 and 128 % out_dim == 0:
        return 128 // out_dim
    if 0 < in_dim <= 128 and 128 % in_dim == 0:
        return 128 // in_dim
    return 1


def _block_diag(w, p):
    """[in, out] -> [p*in, p*out] with p copies of w on the diagonal."""
    if p == 1:
        return w
    return jnp.kron(jnp.eye(p, dtype=w.dtype), w)


def _mlp_kernel(x_ref, w1_ref, w2_ref, w3_ref, w4_ref, o_ref):
    """Fused bias-free 4-layer MLP on one batch-lane-packed tile.

    x_ref : (tile_rows, p*in_dim)  packed activations
    wN_ref: p-way block-diagonal weights, [p*fan_in, p*fan_out]
    o_ref : (tile_rows, p*out_dim) packed outputs (lane-dense)

    All matmuls accumulate in f32 on the MXU; ReLU runs on the f32
    accumulator (VPU) and the activation is cast back to the weight dtype
    only as the next matmul's LHS.  No reshapes / relayouts in-kernel.
    """
    w_dtype = w1_ref.dtype
    h = jnp.dot(x_ref[...], w1_ref[...], preferred_element_type=jnp.float32)
    h = jnp.maximum(h, 0.0).astype(w_dtype)
    h = jnp.dot(h, w2_ref[...], preferred_element_type=jnp.float32)
    h = jnp.maximum(h, 0.0).astype(w_dtype)
    h = jnp.dot(h, w3_ref[...], preferred_element_type=jnp.float32)
    h = jnp.maximum(h, 0.0).astype(w_dtype)
    h = jnp.dot(h, w4_ref[...], preferred_element_type=jnp.float32)
    o_ref[...] = h.astype(o_ref.dtype)


def _vmem_limit_bytes(est_bytes):
    """Return a vmem_limit_bytes value only if needed, clamped per-generation."""
    phys = 128 * 1024 * 1024
    try:
        phys = int(pltpu.get_tpu_info().vmem_capacity_bytes)
    except Exception:
        pass
    cap = (phys * 5) // 8          # headroom for Mosaic internal scratch
    if est_bytes <= 12 * 1024 * 1024:
        return None                # the scoped default is enough on all gens
    return int(min(max(est_bytes + (est_bytes >> 1), 16 * 1024 * 1024), cap))


def my_model_forward(x, w1, w2, w3, w4, *, batch_tile=None, act_dtype=None):
    """Forward pass of My_Model.

    x        : [B, input_dim]
    w1..w4   : PyTorch nn.Linear layout, shape [out_features, in_features]
    act_dtype: optional I/O dtype (defaults to bf16 for large B, else x.dtype);
               matmul accumulation is always f32.
    Returns [B, output_dim] in the activation dtype.
    """
    B, in_dim = x.shape
    out_dim = w4.shape[0]

    if act_dtype is None:
        act_dtype = jnp.bfloat16 if B >= _AUTO_BF16_MIN_BATCH else x.dtype
    out_dtype = jnp.dtype(act_dtype)
    x = x.astype(act_dtype)

    # Batch-lane packing: block-diagonal weights, contiguous-view activations.
    p = _pick_pack(in_dim, out_dim)
    ws = [_block_diag(w.T.astype(act_dtype), p) for w in (w1, w2, w3, w4)]
    w1p, w2p, w3p, w4p = ws

    # ---- batch tile selection ---------------------------------------------
    # Large tiles amortize the ~0.35us/step overhead; always >= 2 "parallel"
    # steps when the batch allows so both v7x TensorCores run and the
    # pipeline overlaps DMA with compute.
    align = 8 * p                      # original rows per (8,128) granule
    if batch_tile is None:
        if B < 2 * align:
            batch_tile = B             # too small to split: one full-array step
        else:
            n_steps = max(2, pl.cdiv(B, _TARGET_TILE_ROWS))
            n_steps += n_steps % 2     # even step count -> both TCs busy
            batch_tile = pl.cdiv(B, n_steps)
    batch_tile = _round_up(max(int(batch_tile), 1), p)
    if batch_tile < B:
        batch_tile = _round_up(batch_tile, align)
    grid_len = pl.cdiv(B, batch_tile)
    b_pad = batch_tile * grid_len

    # Packed-layout invariants (rows would silently interleave if broken).
    assert batch_tile % p == 0
    assert grid_len == 1 or batch_tile % align == 0

    if b_pad != B:
        # Exact only because the MLP is bias-free (zeros propagate).
        x = jnp.pad(x, ((0, b_pad - B), (0, 0)))

    x_packed = x.reshape(b_pad // p, p * in_dim)    # contiguous view, no relayout
    tile_rows = batch_tile // p

    def wspec(w):
        return pl.BlockSpec(w.shape, lambda i: (0, 0))   # VMEM-resident weight

    in_specs = [
        pl.BlockSpec((tile_rows, p * in_dim), lambda i: (i, 0)),
        wspec(w1p), wspec(w2p), wspec(w3p), wspec(w4p),
    ]
    out_specs = pl.BlockSpec((tile_rows, p * out_dim), lambda i: (i, 0))
    out_shape = jax.ShapeDtypeStruct((b_pad // p, p * out_dim), out_dtype)

    # ---- VMEM budget (weights single-buffered: constant index_map) ---------
    io_sz = jnp.dtype(act_dtype).itemsize
    h_dims = (w1.shape[0], w2.shape[0], w3.shape[0])          # hidden widths/row
    tile_io = batch_tile * (in_dim + out_dim) * io_sz         # one buffer
    w_bytes = sum(int(w.size) * jnp.dtype(w.dtype).itemsize for w in ws)
    interm = batch_tile * sum(h_dims) * (4 + io_sz)           # f32 acc + cast copy
    est_vmem = 2 * tile_io + w_bytes + interm + (1 << 20)

    cp_kwargs = dict(dimension_semantics=("parallel",))
    limit = _vmem_limit_bytes(est_vmem)
    if limit is not None:
        cp_kwargs["vmem_limit_bytes"] = limit

    out = pl.pallas_call(
        _mlp_kernel,
        out_shape=out_shape,
        grid_spec=pltpu.PrefetchScalarGridSpec(
            num_scalar_prefetch=0,
            grid=(grid_len,),
            in_specs=in_specs,
            out_specs=out_specs,
        ),
        compiler_params=pltpu.CompilerParams(**cp_kwargs),
    )(x_packed, w1p, w2p, w3p, w4p)

    # Packed [B/p, p*out] -> [B, out] is again a contiguous view.
    return out.reshape(b_pad, out_dim)[:B]


if __name__ == "__main__":
    input_dim, output_dim = 32, 8

    key = jax.random.PRNGKey(0)
    kx, k1, k2, k3, k4, kx2, kx3 = jax.random.split(key, 7)

    # Deterministic init of the four bias-free Linear layers in PyTorch
    # nn.Linear layout: weight shape (out_features, in_features).
    def init_linear(k, fan_in, fan_out):
        bound = 1.0 / math.sqrt(fan_in)
        return jax.random.uniform(
            k, (fan_out, fan_in), minval=-bound, maxval=bound, dtype=jnp.float32)

    w1 = init_linear(k1, input_dim, 16)
    w2 = init_linear(k2, 16, 32)
    w3 = init_linear(k3, 32, 16)
    w4 = init_linear(k4, 16, output_dim)

    def ref_forward(xx):
        h = jnp.maximum(xx @ w1.T, 0.0)
        h = jnp.maximum(h @ w2.T, 0.0)
        h = jnp.maximum(h @ w3.T, 0.0)
        return h @ w4.T

    # --- test 1: small batch, f32, single grid step -------------------------
    x = jax.random.normal(kx, (64, input_dim), dtype=jnp.float32)
    out = jax.block_until_ready(my_model_forward(x, w1, w2, w3, w4))
    assert out.shape == (64, output_dim)
    assert jnp.allclose(out, ref_forward(x), atol=1e-4, rtol=1e-4), \
        "f32 single-tile mismatch"

    # --- test 2: ragged batch, multi-step grid (padding + grid > 1) ---------
    x2 = jax.random.normal(kx2, (300, input_dim), dtype=jnp.float32)
    out2 = jax.block_until_ready(
        my_model_forward(x2, w1, w2, w3, w4, batch_tile=128))
    assert out2.shape == (300, output_dim)
    assert jnp.allclose(out2, ref_forward(x2), atol=1e-4, rtol=1e-4), \
        "f32 multi-tile mismatch"

    # --- test 3: explicit bf16 I/O on a small batch --------------------------
    out3 = jax.block_until_ready(
        my_model_forward(x, w1, w2, w3, w4, act_dtype=jnp.bfloat16))
    assert out3.dtype == jnp.bfloat16
    assert jnp.allclose(out3.astype(jnp.float32), ref_forward(x),
                        atol=1e-1, rtol=1e-1), "bf16 mismatch"

    # --- test 4: larger batch -> auto bf16 I/O + >=2 parallel grid steps -----
    x3 = jax.random.normal(kx3, (4096, input_dim), dtype=jnp.float32)
    out4 = jax.block_until_ready(my_model_forward(x3, w1, w2, w3, w4))
    assert out4.shape == (4096, output_dim) and out4.dtype == jnp.bfloat16
    assert jnp.allclose(out4.astype(jnp.float32), ref_forward(x3),
                        atol=1e-1, rtol=1e-1), "auto-bf16 large-batch mismatch"

    print("KERNEL_OK")
</pallas_src>

<mosaic_0001>
module attributes {stable_mosaic.version = 11 : i64} {
  func.func @_mlp_kernel(%arg0: i32, %arg1: memref<4x512xf32, #tpu.memory_space<vmem>>, %arg2: memref<512x256xf32, #tpu.memory_space<vmem>>, %arg3: memref<256x512xf32, #tpu.memory_space<vmem>>, %arg4: memref<512x256xf32, #tpu.memory_space<vmem>>, %arg5: memref<256x128xf32, #tpu.memory_space<vmem>>, %arg6: memref<4x128xf32, #tpu.memory_space<vmem>>) attributes {dimension_semantics = [#tpu.dimension_semantics<parallel>], iteration_bounds = array<i64: 1>, scalar_prefetch = 0 : i64, scratch_operands = 0 : i64, tpu.core_type = #tpu.core_type<tc>, window_params = [{transform_indices = @transform_0, window_bounds = array<i64: 4, 512>}, {pipeline_mode = #tpu.pipeline_mode<synchronous>, transform_indices = @transform_1, window_bounds = array<i64: 512, 256>}, {pipeline_mode = #tpu.pipeline_mode<synchronous>, transform_indices = @transform_2, window_bounds = array<i64: 256, 512>}, {pipeline_mode = #tpu.pipeline_mode<synchronous>, transform_indices = @transform_3, window_bounds = array<i64: 512, 256>}, {pipeline_mode = #tpu.pipeline_mode<synchronous>, transform_indices = @transform_4, window_bounds = array<i64: 256, 128>}, {transform_indices = @transform_5, window_bounds = array<i64: 4, 128>}]} {
    %c0 = arith.constant 0 : index
    %c0_0 = arith.constant 0 : index
    %0 = vector.load %arg1[%c0, %c0_0] : memref<4x512xf32, #tpu.memory_space<vmem>>, vector<4x512xf32>
    %c0_1 = arith.constant 0 : index
    %c0_2 = arith.constant 0 : index
    %1 = vector.load %arg2[%c0_1, %c0_2] : memref<512x256xf32, #tpu.memory_space<vmem>>, vector<512x256xf32>
    %cst = arith.constant dense<0.000000e+00> : vector<4x256xf32>
    %2 = tpu.matmul %0, %1, %cst {dimension_numbers = #tpu.dot_dimension_numbers<[1], [0], [0], [1], [0, 0, 1, 1], [], []>} : vector<4x512xf32>, vector<512x256xf32>, vector<4x256xf32> -> vector<4x256xf32>
    %cst_3 = arith.constant 0.000000e+00 : f32
    %3 = vector.broadcast %cst_3 : f32 to vector<4x256xf32>
    %4 = arith.maximumf %2, %3 : vector<4x256xf32>
    %c0_4 = arith.constant 0 : index
    %c0_5 = arith.constant 0 : index
    %5 = vector.load %arg3[%c0_4, %c0_5] : memref<256x512xf32, #tpu.memory_space<vmem>>, vector<256x512xf32>
    %cst_6 = arith.constant dense<0.000000e+00> : vector<4x512xf32>
    %6 = tpu.matmul %4, %5, %cst_6 {dimension_numbers = #tpu.dot_dimension_numbers<[1], [0], [0], [1], [0, 0, 1, 1], [], []>} : vector<4x256xf32>, vector<256x512xf32>, vector<4x512xf32> -> vector<4x512xf32>
    %cst_7 = arith.constant 0.000000e+00 : f32
    %7 = vector.broadcast %cst_7 : f32 to vector<4x512xf32>
    %8 = arith.maximumf %6, %7 : vector<4x512xf32>
    %c0_8 = arith.constant 0 : index
    %c0_9 = arith.constant 0 : index
    %9 = vector.load %arg4[%c0_8, %c0_9] : memref<512x256xf32, #tpu.memory_space<vmem>>, vector<512x256xf32>
    %cst_10 = arith.constant dense<0.000000e+00> : vector<4x256xf32>
    %10 = tpu.matmul %8, %9, %cst_10 {dimension_numbers = #tpu.dot_dimension_numbers<[1], [0], [0], [1], [0, 0, 1, 1], [], []>} : vector<4x512xf32>, vector<512x256xf32>, vector<4x256xf32> -> vector<4x256xf32>
    %cst_11 = arith.constant 0.000000e+00 : f32
    %11 = vector.broadcast %cst_11 : f32 to vector<4x256xf32>
    %12 = arith.maximumf %10, %11 : vector<4x256xf32>
    %c0_12 = arith.constant 0 : index
    %c0_13 = arith.constant 0 : index
    %13 = vector.load %arg5[%c0_12, %c0_13] : memref<256x128xf32, #tpu.memory_space<vmem>>, vector<256x128xf32>
    %cst_14 = arith.constant dense<0.000000e+00> : vector<4x128xf32>
    %14 = tpu.matmul %12, %13, %cst_14 {dimension_numbers = #tpu.dot_dimension_numbers<[1], [0], [0], [1], [0, 0, 1, 1], [], []>} : vector<4x256xf32>, vector<256x128xf32>, vector<4x128xf32> -> vector<4x128xf32>
    %c0_15 = arith.constant 0 : index
    %c0_16 = arith.constant 0 : index
    %15 = vector.load %arg6[%c0_15, %c0_16] : memref<4x128xf32, #tpu.memory_space<vmem>>, vector<4x128xf32>
    tpu.vector_store %arg6[%c0_15, %c0_16], %14 {strides = array<i32>} : memref<4x128xf32, #tpu.memory_space<vmem>>, vector<4x128xf32>,
    return
  }
  func.func @transform_0(%arg0: i32) -> (i32, i32) {
    %c0_i32 = arith.constant 0 : i32
    %c0_i32_0 = arith.constant 0 : i32
    return %arg0, %c0_i32 : i32, i32
  }
  func.func @transform_1(%arg0: i32) -> (i32, i32) {
    %c0_i32 = arith.constant 0 : i32
    %c0_i32_0 = arith.constant 0 : i32
    %c0_i32_1 = arith.constant 0 : i32
    return %c0_i32, %c0_i32_0 : i32, i32
  }
  func.func @transform_2(%arg0: i32) -> (i32, i32) {
    %c0_i32 = arith.constant 0 : i32
    %c0_i32_0 = arith.constant 0 : i32
    %c0_i32_1 = arith.constant 0 : i32
    return %c0_i32, %c0_i32_0 : i32, i32
  }
  func.func @transform_3(%arg0: i32) -> (i32, i32) {
    %c0_i32 = arith.constant 0 : i32
    %c0_i32_0 = arith.constant 0 : i32
    %c0_i32_1 = arith.constant 0 : i32
    return %c0_i32, %c0_i32_0 : i32, i32
  }
  func.func @transform_4(%arg0: i32) -> (i32, i32) {
    %c0_i32 = arith.constant 0 : i32
    %c0_i32_0 = arith.constant 0 : i32
    %c0_i32_1 = arith.constant 0 : i32
    return %c0_i32, %c0_i32_0 : i32, i32
  }
  func.func @transform_5(%arg0: i32) -> (i32, i32) {
    %c0_i32 = arith.constant 0 : i32
    %c0_i32_0 = arith.constant 0 : i32
    return %arg0, %c0_i32 : i32, i32
  }
}

</mosaic_0001>

<llo_original>
// kernel: tpu_custom_call.1
$region0: #{tpu_custom_call.1}
  #allocation0 [shape = 'u32[]', space=smem, size = 0x4, offset = 0x4, fixed_abs, tag = 'smem constant byte address 0x4 - core index']
  #allocation1 [shape = 'u32[144,128]{1,0:T(1,128)}', space=vmem, size = 0x12000, scoped, tag = 'internal scratch']
  %s0 = inlined_call_operand.hbm [shape: f32[4,512], index: 0, kind: input, shape index: {}]
  %s1 = inlined_call_operand.hbm [shape: f32[512,256], index: 1, kind: input, shape index: {}]
  %s2 = inlined_call_operand.hbm [shape: f32[256,512], index: 2, kind: input, shape index: {}]
  %s3 = inlined_call_operand.hbm [shape: f32[512,256], index: 3, kind: input, shape index: {}]
  %s4 = inlined_call_operand.hbm [shape: f32[256,128], index: 4, kind: input, shape index: {}]
  %s5 = inlined_call_operand.hbm [shape: f32[4,128], index: 5, kind: output, shape index: {}]
  %s6 = sld [smem:[#allocation0]]
  $region50: #{tpu_custom_call.1} parent=0
    _
  %s8 = ssub.s32 1, %s6
  %s9 = scalar_select 0, %s8, %s6
  $region1: #{tpu_custom_call.1} parent=0
    #allocation2 [shape = 'u8[8192]{0}', space=vmem, size = 0x2000, scoped, tag = 'input window, operand 0, single buffered']
    #allocation3 [shape = 's32[1]{0}', space=sflag, size = 0x4, scoped, tag = 'scoped memory for tpu_custom_call.1']
    #allocation4 [shape = 's32[1]{0}', space=sflag, size = 0x4, scoped, tag = 'scoped memory for tpu_custom_call.1']
    #allocation5 [shape = 'u8[524288]{0}', space=vmem, size = 0x80000, scoped, tag = 'input window, operand 1, single buffered']
    #allocation6 [shape = 's32[1]{0}', space=sflag, size = 0x4, scoped, tag = 'scoped memory for tpu_custom_call.1']
    #allocation7 [shape = 'u8[524288]{0}', space=vmem, size = 0x80000, scoped, tag = 'input window, operand 2, single buffered']
    #allocation8 [shape = 'u8[524288]{0}', space=vmem, size = 0x80000, scoped, tag = 'input window, operand 3, single buffered']
    #allocation9 [shape = 's32[1]{0}', space=sflag, size = 0x4, scoped, tag = 'scoped memory for tpu_custom_call.1']
    #allocation10 [shape = 'u8[131072]{0}', space=vmem, size = 0x20000, scoped, tag = 'input window, operand 4, single buffered']
    #allocation11 [shape = 'u8[2048]{0}', space=vmem, size = 0x800, scoped, tag = 'output window, operand 0, single buffered']
    %10 = vsyncpa [#allocation3], 0
    %11 = vsyncpa [#allocation6], 0
    %12 = vsyncpa [#allocation9], 0
    %13 = vsyncpa [#allocation4], 0
    // Predicated region
    $region2: #{tpu_custom_call.1} parent=1 // pred_check
      _
    $region3: #{tpu_custom_call.1} parent=1 // pred_check_branch
      %15 = sbr.rel (0) target = $region5
    $region4: #{tpu_custom_call.1} parent=1 // pred_region
      %s17 = ssub.s32 256, 256
      %18 = vsyncadd [#allocation3], %s17
      %s20 = sshll.u32 [#allocation2], 4
      %s21 = int_to_ptr.vmem [resolvable:$true] %s20
      %23 = dma.hbm_to_vmem [thread:$0]  %s0, 256, %s21, [#allocation3]
    $region5: #{tpu_custom_call.1} parent=1 // pred_fallthru
      _
    // Predicated region
    $region6: #{tpu_custom_call.1} parent=1 // pred_check
      _
    $region7: #{tpu_custom_call.1} parent=1 // pred_check_branch
      %25 = sbr.rel (0) target = $region9
    $region8: #{tpu_custom_call.1} parent=1 // pred_region
      %s27 = ssub.s32 16384, 16384
      %28 = vsyncadd [#allocation6], %s27
      %s29 = sshll.u32 [#allocation5], 4
      %s30 = int_to_ptr.vmem [resolvable:$true] %s29
      %35 = dma.hbm_to_vmem [thread:$0]  %s1, 16384, %s30, [#allocation6], 256, 256, 16
    $region9: #{tpu_custom_call.1} parent=1 // pred_fallthru
      _
    // Predicated region
    $region10: #{tpu_custom_call.1} parent=1 // pred_check
      _
    $region11: #{tpu_custom_call.1} parent=1 // pred_check_branch
      %37 = sbr.rel (0) target = $region13
    $region12: #{tpu_custom_call.1} parent=1 // pred_region
      %s39 = ssub.s32 16384, 16384
      %40 = vsyncadd [#allocation6], %s39
      %s41 = sshll.u32 [#allocation7], 4
      %s42 = int_to_ptr.vmem [resolvable:$true] %s41
      %47 = dma.hbm_to_vmem [thread:$0]  %s2, 16384, %s42, [#allocation6], 512, 512, 32
    $region13: #{tpu_custom_call.1} parent=1 // pred_fallthru
      _
    // Predicated region
    $region14: #{tpu_custom_call.1} parent=1 // pred_check
      _
    $region15: #{tpu_custom_call.1} parent=1 // pred_check_branch
      %49 = sbr.rel (0) target = $region17
    $region16: #{tpu_custom_call.1} parent=1 // pred_region
      %s51 = ssub.s32 16384, 16384
      %52 = vsyncadd [#allocation9], %s51
      %s53 = sshll.u32 [#allocation8], 4
      %s54 = int_to_ptr.vmem [resolvable:$true] %s53
      %59 = dma.hbm_to_vmem [thread:$0]  %s3, 16384, %s54, [#allocation9], 256, 256, 16
    $region17: #{tpu_custom_call.1} parent=1 // pred_fallthru
      _
    // Predicated region
    $region18: #{tpu_custom_call.1} parent=1 // pred_check
      _
    $region19: #{tpu_custom_call.1} parent=1 // pred_check_branch
      %61 = sbr.rel (0) target = $region21
    $region20: #{tpu_custom_call.1} parent=1 // pred_region
      %s63 = ssub.s32 4096, 4096
      %64 = vsyncadd [#allocation9], %s63
      %s65 = sshll.u32 [#allocation10], 4
      %s66 = int_to_ptr.vmem [resolvable:$true] %s65
      %71 = dma.hbm_to_vmem [thread:$0]  %s4, 4096, %s66, [#allocation9], 128, 128, 8
    $region21: #{tpu_custom_call.1} parent=1 // pred_fallthru
      _
    // Predicated region
    $region22: #{tpu_custom_call.1} parent=1 // pred_check
      _
    $region23: #{tpu_custom_call.1} parent=1 // pred_check_branch
      %73 = sbr.rel (0) target = $region25
    $region24: #{tpu_custom_call.1} parent=1 // pred_region
      %74 = dma.done [#allocation3], 256
    $region25: #{tpu_custom_call.1} parent=1 // pred_fallthru
      _
    // Predicated region
    $region26: #{tpu_custom_call.1} parent=1 // pred_check
      _
    $region27: #{tpu_custom_call.1} parent=1 // pred_check_branch
      %76 = sbr.rel (0) target = $region29
    $region28: #{tpu_custom_call.1} parent=1 // pred_region
      %77 = dma.done [#allocation6], 16384
    $region29: #{tpu_custom_call.1} parent=1 // pred_fallthru
      _
    // Predicated region
    $region30: #{tpu_custom_call.1} parent=1 // pred_check
      _
    $region31: #{tpu_custom_call.1} parent=1 // pred_check_branch
      %79 = sbr.rel (0) target = $region33
    $region32: #{tpu_custom_call.1} parent=1 // pred_region
      %80 = dma.done [#allocation6], 16384
    $region33: #{tpu_custom_call.1} parent=1 // pred_fallthru
      _
    // Predicated region
    $region34: #{tpu_custom_call.1} parent=1 // pred_check
      _
    $region35: #{tpu_custom_call.1} parent=1 // pred_check_branch
      %82 = sbr.rel (0) target = $region37
    $region36: #{tpu_custom_call.1} parent=1 // pred_region
      %83 = dma.done [#allocation9], 16384
    $region37: #{tpu_custom_call.1} parent=1 // pred_fallthru
      _
    // Predicated region
    $region38: #{tpu_custom_call.1} parent=1 // pred_check
      _
    $region39: #{tpu_custom_call.1} parent=1 // pred_check_branch
      %85 = sbr.rel (0) target = $region41
    $region40: #{tpu_custom_call.1} parent=1 // pred_region
      %86 = dma.done [#allocation9], 4096
    $region41: #{tpu_custom_call.1} parent=1 // pred_fallthru
      _
    %v87 = vld [vmem:[#allocation2] sm:$0xff]
    %v88 = vld [vmem:[#allocation2 + $0x8] sm:$0xff]
    %v89 = vld [vmem:[#allocation5] sm:$0xff]
    %v90 = vld [vmem:[#allocation5 + $0x8] sm:$0xff]
    %v91 = vld [vmem:[#allocation5 + $0x10] sm:$0xff]
    %v92 = vld [vmem:[#allocation5 + $0x18] sm:$0xff]
    %v93 = vld [vmem:[#allocation5 + $0x20] sm:$0xff]
    %v94 = vld [vmem:[#allocation5 + $0x28] sm:$0xff]
    %v95 = vld [vmem:[#allocation5 + $0x30] sm:$0xff]
    %v96 = vld [vmem:[#allocation5 + $0x38] sm:$0xff]
    %v97 = vld [vmem:[#allocation5 + $0x40] sm:$0xff]
    %v98 = vld [vmem:[#allocation5 + $0x48] sm:$0xff]
    %v99 = vld [vmem:[#allocation5 + $0x50] sm:$0xff]
    %v100 = vld [vmem:[#allocation5 + $0x58] sm:$0xff]
    %v101 = vld [vmem:[#allocation5 + $0x60] sm:$0xff]
    %v102 = vld [vmem:[#allocation5 + $0x68] sm:$0xff]
    %v103 = vld [vmem:[#allocation5 + $0x70] sm:$0xff]
    %v104 = vld [vmem:[#allocation5 + $0x78] sm:$0xff]
    %v105 = vld [vmem:[#allocation5 + $0x80] sm:$0xff]
    %v106 = vld [vmem:[#allocation5 + $0x88] sm:$0xff]
    %v107 = vld [vmem:[#allocation5 + $0x90] sm:$0xff]
    %v108 = vld [vmem:[#allocation5 + $0x98] sm:$0xff]
    %v109 = vld [vmem:[#allocation5 + $0xa0] sm:$0xff]
    %v110 = vld [vmem:[#allocation5 + $0xa8] sm:$0xff]
    %v111 = vld [vmem:[#allocation5 + $0xb0] sm:$0xff]
    %v112 = vld [vmem:[#allocation5 + $0xb8] sm:$0xff]
    %v113 = vld [vmem:[#allocation5 + $0xc0] sm:$0xff]
    %v114 = vld [vmem:[#allocation5 + $0xc8] sm:$0xff]
    %v115 = vld [vmem:[#allocation5 + $0xd0] sm:$0xff]
    %v116 = vld [vmem:[#allocation5 + $0xd8] sm:$0xff]
    %v117 = vld [vmem:[#allocation5 + $0xe0] sm:$0xff]
    %v118 = vld [vmem:[#allocation5 + $0xe8] sm:$0xff]
    %v119 = vld [vmem:[#allocation5 + $0xf0] sm:$0xff]
    %v120 = vld [vmem:[#allocation5 + $0xf8] sm:$0xff]
    %v121 = vld [vmem:[#allocation5 + $0x100] sm:$0xff]
    %v122 = vld [vmem:[#allocation5 + $0x108] sm:$0xff]
    %v123 = vld [vmem:[#allocation5 + $0x110] sm:$0xff]
    %v124 = vld [vmem:[#allocation5 + $0x118] sm:$0xff]
    %v125 = vld [vmem:[#allocation5 + $0x120] sm:$0xff]
    %v126 = vld [vmem:[#allocation5 + $0x128] sm:$0xff]
    %v127 = vld [vmem:[#allocation5 + $0x130] sm:$0xff]
    %v128 = vld [vmem:[#allocation5 + $0x138] sm:$0xff]
    %v129 = vld [vmem:[#allocation5 + $0x140] sm:$0xff]
    %v130 = vld [vmem:[#allocation5 + $0x148] sm:$0xff]
    %v131 = vld [vmem:[#allocation5 + $0x150] sm:$0xff]
    %v132 = vld [vmem:[#allocation5 + $0x158] sm:$0xff]
    %v133 = vld [vmem:[#allocation5 + $0x160] sm:$0xff]
    %v134 = vld [vmem:[#allocation5 + $0x168] sm:$0xff]
    %v135 = vld [vmem:[#allocation5 + $0x170] sm:$0xff]
    %v136 = vld [vmem:[#allocation5 + $0x178] sm:$0xff]
    %v137 = vld [vmem:[#allocation5 + $0x180] sm:$0xff]
    %v138 = vld [vmem:[#allocation5 + $0x188] sm:$0xff]
    %v139 = vld [vmem:[#allocation5 + $0x190] sm:$0xff]
    %v140 = vld [vmem:[#allocation5 + $0x198] sm:$0xff]
    %v141 = vld [vmem:[#allocation5 + $0x1a0] sm:$0xff]
    %v142 = vld [vmem:[#allocation5 + $0x1a8] sm:$0xff]
    %v143 = vld [vmem:[#allocation5 + $0x1b0] sm:$0xff]
    %v144 = vld [vmem:[#allocation5 + $0x1b8] sm:$0xff]
    %v145 = vld [vmem:[#allocation5 + $0x1c0] sm:$0xff]
    %v146 = vld [vmem:[#allocation5 + $0x1c8] sm:$0xff]
    %v147 = vld [vmem:[#allocation5 + $0x1d0] sm:$0xff]
    %v148 = vld [vmem:[#allocation5 + $0x1d8] sm:$0xff]
    %v149 = vld [vmem:[#allocation5 + $0x1e0] sm:$0xff]
    %v150 = vld [vmem:[#allocation5 + $0x1e8] sm:$0xff]
    %v151 = vld [vmem:[#allocation5 + $0x1f0] sm:$0xff]
    %v152 = vld [vmem:[#allocation5 + $0x1f8] sm:$0xff]
    %v153 = vld [vmem:[#allocation5 + $0x200] sm:$0xff]
    %v154 = vld [vmem:[#allocation5 + $0x208] sm:$0xff]
    %v155 = vld [vmem:[#allocation5 + $0x210] sm:$0xff]
    %v156 = vld [vmem:[#allocation5 + $0x218] sm:$0xff]
    %v157 = vld [vmem:[#allocation5 + $0x220] sm:$0xff]
    %v158 = vld [vmem:[#allocation5 + $0x228] sm:$0xff]
    %v159 = vld [vmem:[#allocation5 + $0x230] sm:$0xff]
    %v160 = vld [vmem:[#allocation5 + $0x238] sm:$0xff]
    %v161 = vld [vmem:[#allocation5 + $0x240] sm:$0xff]
    %v162 = vld [vmem:[#allocation5 + $0x248] sm:$0xff]
    %v163 = vld [vmem:[#allocation5 + $0x250] sm:$0xff]
    %v164 = vld [vmem:[#allocation5 + $0x258] sm:$0xff]
    %v165 = vld [vmem:[#allocation5 + $0x260] sm:$0xff]
    %v166 = vld [vmem:[#allocation5 + $0x268] sm:$0xff]
    %v167 = vld [vmem:[#allocation5 + $0x270] sm:$0xff]
    %v168 = vld [vmem:[#allocation5 + $0x278] sm:$0xff]
    %v169 = vld [vmem:[#allocation5 + $0x280] sm:$0xff]
    %v170 = vld [vmem:[#allocation5 + $0x288] sm:$0xff]
    %v171 = vld [vmem:[#allocation5 + $0x290] sm:$0xff]
    %v172 = vld [vmem:[#allocation5 + $0x298] sm:$0xff]
    %v173 = vld [vmem:[#allocation5 + $0x2a0] sm:$0xff]
    %v174 = vld [vmem:[#allocation5 + $0x2a8] sm:$0xff]
    %v175 = vld [vmem:[#allocation5 + $0x2b0] sm:$0xff]
    %v176 = vld [vmem:[#allocation5 + $0x2b8] sm:$0xff]
    %v177 = vld [vmem:[#allocation5 + $0x2c0] sm:$0xff]
    %v178 = vld [vmem:[#allocation5 + $0x2c8] sm:$0xff]
    %v179 = vld [vmem:[#allocation5 + $0x2d0] sm:$0xff]
    %v180 = vld [vmem:[#allocation5 + $0x2d8] sm:$0xff]
    %v181 = vld [vmem:[#allocation5 + $0x2e0] sm:$0xff]
    %v182 = vld [vmem:[#allocation5 + $0x2e8] sm:$0xff]
    %v183 = vld [vmem:[#allocation5 + $0x2f0] sm:$0xff]
    %v184 = vld [vmem:[#allocation5 + $0x2f8] sm:$0xff]
    %v185 = vld [vmem:[#allocation5 + $0x300] sm:$0xff]
    %v186 = vld [vmem:[#allocation5 + $0x308] sm:$0xff]
    %v187 = vld [vmem:[#allocation5 + $0x310] sm:$0xff]
    %v188 = vld [vmem:[#allocation5 + $0x318] sm:$0xff]
    %v189 = vld [vmem:[#allocation5 + $0x320] sm:$0xff]
    %v190 = vld [vmem:[#allocation5 + $0x328] sm:$0xff]
    %v191 = vld [vmem:[#allocation5 + $0x330] sm:$0xff]
    %v192 = vld [vmem:[#allocation5 + $0x338] sm:$0xff]
    %v193 = vld [vmem:[#allocation5 + $0x340] sm:$0xff]
    %v194 = vld [vmem:[#allocation5 + $0x348] sm:$0xff]
    %v195 = vld [vmem:[#allocation5 + $0x350] sm:$0xff]
    %v196 = vld [vmem:[#allocation5 + $0x358] sm:$0xff]
    %v197 = vld [vmem:[#allocation5 + $0x360] sm:$0xff]
    %v198 = vld [vmem:[#allocation5 + $0x368] sm:$0xff]
    %v199 = vld [vmem:[#allocation5 + $0x370] sm:$0xff]
    %v200 = vld [vmem:[#allocation5 + $0x378] sm:$0xff]
    %v201 = vld [vmem:[#allocation5 + $0x380] sm:$0xff]
    %v202 = vld [vmem:[#allocation5 + $0x388] sm:$0xff]
    %v203 = vld [vmem:[#allocation5 + $0x390] sm:$0xff]
    %v204 = vld [vmem:[#allocation5 + $0x398] sm:$0xff]
    %v205 = vld [vmem:[#allocation5 + $0x3a0] sm:$0xff]
    %v206 = vld [vmem:[#allocation5 + $0x3a8] sm:$0xff]
    %v207 = vld [vmem:[#allocation5 + $0x3b0] sm:$0xff]
    %v208 = vld [vmem:[#allocation5 + $0x3b8] sm:$0xff]
    %v209 = vld [vmem:[#allocation5 + $0x3c0] sm:$0xff]
    %v210 = vld [vmem:[#allocation5 + $0x3c8] sm:$0xff]
    %v211 = vld [vmem:[#allocation5 + $0x3d0] sm:$0xff]
    %v212 = vld [vmem:[#allocation5 + $0x3d8] sm:$0xff]
    %v213 = vld [vmem:[#allocation5 + $0x3e0] sm:$0xff]
    %v214 = vld [vmem:[#allocation5 + $0x3e8] sm:$0xff]
    %v215 = vld [vmem:[#allocation5 + $0x3f0] sm:$0xff]
    %v216 = vld [vmem:[#allocation5 + $0x3f8] sm:$0xff]
    %v219 = vcombine.high %v87, %v87
    %v220 = vcombine.high %v88, %v88
    %223 = vmatprep.subr.mxu0 %v90
    %224 = vmatpush1.msra.mxu0 %v89
    %225 = vmatprep.subr.mxu0 %v92
    %226 = vmatpush1.msra.mxu0 %v91
    %227 = vmatprep.subr.mxu0 %v94
    %228 = vmatpush1.msra.mxu0 %v93
    %229 = vmatprep.subr.mxu0 %v96
    %230 = vmatpush1.msra.mxu0 %v95
    %231 = vmatprep.subr.mxu0 %v98
    %232 = vmatpush1.msra.mxu0 %v97
    %233 = vmatprep.subr.mxu0 %v100
    %234 = vmatpush1.msra.mxu0 %v99
    %235 = vmatprep.subr.mxu0 %v102
    %236 = vmatpush1.msra.mxu0 %v101
    %237 = vmatprep.subr.mxu0 %v104
    %238 = vmatpush1.msra.mxu0 %v103
    %239 = vmatprep.subr.mxu0 %v106
    %240 = vmatpush1.msra.mxu0 %v105
    %241 = vmatprep.subr.mxu0 %v108
    %242 = vmatpush1.msra.mxu0 %v107
    %243 = vmatprep.subr.mxu0 %v110
    %244 = vmatpush1.msra.mxu0 %v109
    %245 = vmatprep.subr.mxu0 %v112
    %246 = vmatpush1.msra.mxu0 %v111
    %247 = vmatprep.subr.mxu0 %v114
    %248 = vmatpush1.msra.mxu0 %v113
    %249 = vmatprep.subr.mxu0 %v116
    %250 = vmatpush1.msra.mxu0 %v115
    %251 = vmatprep.subr.mxu0 %v118
    %252 = vmatpush1.msra.mxu0 %v117
    %253 = vmatprep.subr.mxu0 %v120
    %254 = vmatpush1.msra.mxu0 %v119
    %255 = vmatprep.subr.mxu0 %v122
    %256 = vmatpush1.msra.mxu0 %v121
    %257 = vmatprep.subr.mxu0 %v124
    %258 = vmatpush1.msra.mxu0 %v123
    %259 = vmatprep.subr.mxu0 %v126
    %260 = vmatpush1.msra.mxu0 %v125
    %261 = vmatprep.subr.mxu0 %v128
    %262 = vmatpush1.msra.mxu0 %v127
    %263 = vmatprep.subr.mxu0 %v130
    %264 = vmatpush1.msra.mxu0 %v129
    %265 = vmatprep.subr.mxu0 %v132
    %266 = vmatpush1.msra.mxu0 %v131
    %267 = vmatprep.subr.mxu0 %v134
    %268 = vmatpush1.msra.mxu0 %v133
    %269 = vmatprep.subr.mxu0 %v136
    %270 = vmatpush1.msra.mxu0 %v135
    %271 = vmatprep.subr.mxu0 %v138
    %272 = vmatpush1.msra.mxu0 %v137
    %273 = vmatprep.subr.mxu0 %v140
    %274 = vmatpush1.msra.mxu0 %v139
    %275 = vmatprep.subr.mxu0 %v142
    %276 = vmatpush1.msra.mxu0 %v141
    %277 = vmatprep.subr.mxu0 %v144
    %278 = vmatpush1.msra.mxu0 %v143
    %279 = vmatprep.subr.mxu0 %v146
    %280 = vmatpush1.msra.mxu0 %v145
    %281 = vmatprep.subr.mxu0 %v148
    %282 = vmatpush1.msra.mxu0 %v147
    %283 = vmatprep.subr.mxu0 %v150
    %284 = vmatpush1.msra.mxu0 %v149
    %285 = vmatprep.subr.mxu0 %v152
    %286 = vmatpush1.msra.mxu0 %v151
    %287 = vmatprep.mubr.f32.mxu0 %v219
    %288 = vmatmul.mubr.f32.gmra.mrb[0].mxu0 %v87
    %v289 = vpop.f32.mrb[0].mxu0
    %v290 = vadd.f32 0.0, %v289
    %v291 = vpop.f32.mrb[0].mxu0
    %v292 = vadd.f32 0.0, %v291
    %293 = vdwg.mxu0
    %294 = vmatprep.subr.mxu0 %v154
    %295 = vmatpush1.msra.mxu0 %v153
    %296 = vmatprep.subr.mxu0 %v156
    %297 = vmatpush1.msra.mxu0 %v155
    %298 = vmatprep.subr.mxu0 %v158
    %299 = vmatpush1.msra.mxu0 %v157
    %300 = vmatprep.subr.mxu0 %v160
    %301 = vmatpush1.msra.mxu0 %v159
    %302 = vmatprep.subr.mxu0 %v162
    %303 = vmatpush1.msra.mxu0 %v161
    %304 = vmatprep.subr.mxu0 %v164
    %305 = vmatpush1.msra.mxu0 %v163
    %306 = vmatprep.subr.mxu0 %v166
    %307 = vmatpush1.msra.mxu0 %v165
    %308 = vmatprep.subr.mxu0 %v168
    %309 = vmatpush1.msra.mxu0 %v167
    %310 = vmatprep.subr.mxu0 %v170
    %311 = vmatpush1.msra.mxu0 %v169
    %312 = vmatprep.subr.mxu0 %v172
    %313 = vmatpush1.msra.mxu0 %v171
    %314 = vmatprep.subr.mxu0 %v174
    %315 = vmatpush1.msra.mxu0 %v173
    %316 = vmatprep.subr.mxu0 %v176
    %317 = vmatpush1.msra.mxu0 %v175
    %318 = vmatprep.subr.mxu0 %v178
    %319 = vmatpush1.msra.mxu0 %v177
    %320 = vmatprep.subr.mxu0 %v180
    %321 = vmatpush1.msra.mxu0 %v179
    %322 = vmatprep.subr.mxu0 %v182
    %323 = vmatpush1.msra.mxu0 %v181
    %324 = vmatprep.subr.mxu0 %v184
    %325 = vmatpush1.msra.mxu0 %v183
    %326 = vmatprep.subr.mxu0 %v186
    %327 = vmatpush1.msra.mxu0 %v185
    %328 = vmatprep.subr.mxu0 %v188
    %329 = vmatpush1.msra.mxu0 %v187
    %330 = vmatprep.subr.mxu0 %v190
    %331 = vmatpush1.msra.mxu0 %v189
    %332 = vmatprep.subr.mxu0 %v192
    %333 = vmatpush1.msra.mxu0 %v191
    %334 = vmatprep.subr.mxu0 %v194
    %335 = vmatpush1.msra.mxu0 %v193
    %336 = vmatprep.subr.mxu0 %v196
    %337 = vmatpush1.msra.mxu0 %v195
    %338 = vmatprep.subr.mxu0 %v198
    %339 = vmatpush1.msra.mxu0 %v197
    %340 = vmatprep.subr.mxu0 %v200
    %341 = vmatpush1.msra.mxu0 %v199
    %342 = vmatprep.subr.mxu0 %v202
    %343 = vmatpush1.msra.mxu0 %v201
    %344 = vmatprep.subr.mxu0 %v204
    %345 = vmatpush1.msra.mxu0 %v203
    %346 = vmatprep.subr.mxu0 %v206
    %347 = vmatpush1.msra.mxu0 %v205
    %348 = vmatprep.subr.mxu0 %v208
    %349 = vmatpush1.msra.mxu0 %v207
    %350 = vmatprep.subr.mxu0 %v210
    %351 = vmatpush1.msra.mxu0 %v209
    %352 = vmatprep.subr.mxu0 %v212
    %353 = vmatpush1.msra.mxu0 %v211
    %354 = vmatprep.subr.mxu0 %v214
    %355 = vmatpush1.msra.mxu0 %v213
    %356 = vmatprep.subr.mxu0 %v216
    %357 = vmatpush1.msra.mxu0 %v215
    %358 = vmatprep.mubr.f32.mxu0 %v220
    %359 = vmatmul.mubr.f32.gmra.mrb[0].mxu0 %v88
    %v360 = vpop.f32.mrb[0].mxu0
    %v361 = vadd.f32 %v290, %v360
    %v362 = vpop.f32.mrb[0].mxu0
    %v363 = vadd.f32 %v292, %v362
    %364 = vdwg.mxu0
    %v365 = vmax.f32 %v361, 0.0
    %v366 = vmax.f32 %v363, 0.0
    %v367 = vld [vmem:[#allocation7] sm:$0xff]
    %v368 = vld [vmem:[#allocation7 + $0x8] sm:$0xff]
    %v369 = vld [vmem:[#allocation7 + $0x10] sm:$0xff]
    %v370 = vld [vmem:[#allocation7 + $0x18] sm:$0xff]
    %v371 = vld [vmem:[#allocation7 + $0x20] sm:$0xff]
    %v372 = vld [vmem:[#allocation7 + $0x28] sm:$0xff]
    %v373 = vld [vmem:[#allocation7 + $0x30] sm:$0xff]
    %v374 = vld [vmem:[#allocation7 + $0x38] sm:$0xff]
    %v375 = vld [vmem:[#allocation7 + $0x40] sm:$0xff]
    %v376 = vld [vmem:[#allocation7 + $0x48] sm:$0xff]
    %v377 = vld [vmem:[#allocation7 + $0x50] sm:$0xff]
    %v378 = vld [vmem:[#allocation7 + $0x58] sm:$0xff]
    %v379 = vld [vmem:[#allocation7 + $0x60] sm:$0xff]
    %v380 = vld [vmem:[#allocation7 + $0x68] sm:$0xff]
    %v381 = vld [vmem:[#allocation7 + $0x70] sm:$0xff]
    %v382 = vld [vmem:[#allocation7 + $0x78] sm:$0xff]
    %v383 = vld [vmem:[#allocation7 + $0x80] sm:$0xff]
    %v384 = vld [vmem:[#allocation7 + $0x88] sm:$0xff]
    %v385 = vld [vmem:[#allocation7 + $0x90] sm:$0xff]
    %v386 = vld [vmem:[#allocation7 + $0x98] sm:$0xff]
    %v387 = vld [vmem:[#allocation7 + $0xa0] sm:$0xff]
    %v388 = vld [vmem:[#allocation7 + $0xa8] sm:$0xff]
    %v389 = vld [vmem:[#allocation7 + $0xb0] sm:$0xff]
    %v390 = vld [vmem:[#allocation7 + $0xb8] sm:$0xff]
    %v391 = vld [vmem:[#allocation7 + $0xc0] sm:$0xff]
    %v392 = vld [vmem:[#allocation7 + $0xc8] sm:$0xff]
    %v393 = vld [vmem:[#allocation7 + $0xd0] sm:$0xff]
    %v394 = vld [vmem:[#allocation7 + $0xd8] sm:$0xff]
    %v395 = vld [vmem:[#allocation7 + $0xe0] sm:$0xff]
    %v396 = vld [vmem:[#allocation7 + $0xe8] sm:$0xff]
    %v397 = vld [vmem:[#allocation7 + $0xf0] sm:$0xff]
    %v398 = vld [vmem:[#allocation7 + $0xf8] sm:$0xff]
    %v399 = vld [vmem:[#allocation7 + $0x100] sm:$0xff]
    %v400 = vld [vmem:[#allocation7 + $0x108] sm:$0xff]
    %v401 = vld [vmem:[#allocation7 + $0x110] sm:$0xff]
    %v402 = vld [vmem:[#allocation7 + $0x118] sm:$0xff]
    %v403 = vld [vmem:[#allocation7 + $0x120] sm:$0xff]
    %v404 = vld [vmem:[#allocation7 + $0x128] sm:$0xff]
    %v405 = vld [vmem:[#allocation7 + $0x130] sm:$0xff]
    %v406 = vld [vmem:[#allocation7 + $0x138] sm:$0xff]
    %v407 = vld [vmem:[#allocation7 + $0x140] sm:$0xff]
    %v408 = vld [vmem:[#allocation7 + $0x148] sm:$0xff]
    %v409 = vld [vmem:[#allocation7 + $0x150] sm:$0xff]
    %v410 = vld [vmem:[#allocation7 + $0x158] sm:$0xff]
    %v411 = vld [vmem:[#allocation7 + $0x160] sm:$0xff]
    %v412 = vld [vmem:[#allocation7 + $0x168] sm:$0xff]
    %v413 = vld [vmem:[#allocation7 + $0x170] sm:$0xff]
    %v414 = vld [vmem:[#allocation7 + $0x178] sm:$0xff]
    %v415 = vld [vmem:[#allocation7 + $0x180] sm:$0xff]
    %v416 = vld [vmem:[#allocation7 + $0x188] sm:$0xff]
    %v417 = vld [vmem:[#allocation7 + $0x190] sm:$0xff]
    %v418 = vld [vmem:[#allocation7 + $0x198] sm:$0xff]
    %v419 = vld [vmem:[#allocation7 + $0x1a0] sm:$0xff]
    %v420 = vld [vmem:[#allocation7 + $0x1a8] sm:$0xff]
    %v421 = vld [vmem:[#allocation7 + $0x1b0] sm:$0xff]
    %v422 = vld [vmem:[#allocation7 + $0x1b8] sm:$0xff]
    %v423 = vld [vmem:[#allocation7 + $0x1c0] sm:$0xff]
    %v424 = vld [vmem:[#allocation7 + $0x1c8] sm:$0xff]
    %v425 = vld [vmem:[#allocation7 + $0x1d0] sm:$0xff]
    %v426 = vld [vmem:[#allocation7 + $0x1d8] sm:$0xff]
    %v427 = vld [vmem:[#allocation7 + $0x1e0] sm:$0xff]
    %v428 = vld [vmem:[#allocation7 + $0x1e8] sm:$0xff]
    %v429 = vld [vmem:[#allocation7 + $0x1f0] sm:$0xff]
    %v430 = vld [vmem:[#allocation7 + $0x1f8] sm:$0xff]
    %v431 = vld [vmem:[#allocation7 + $0x200] sm:$0xff]
    %v432 = vld [vmem:[#allocation7 + $0x208] sm:$0xff]
    %v433 = vld [vmem:[#allocation7 + $0x210] sm:$0xff]
    %v434 = vld [vmem:[#allocation7 + $0x218] sm:$0xff]
    %v435 = vld [vmem:[#allocation7 + $0x220] sm:$0xff]
    %v436 = vld [vmem:[#allocation7 + $0x228] sm:$0xff]
    %v437 = vld [vmem:[#allocation7 + $0x230] sm:$0xff]
    %v438 = vld [vmem:[#allocation7 + $0x238] sm:$0xff]
    %v439 = vld [vmem:[#allocation7 + $0x240] sm:$0xff]
    %v440 = vld [vmem:[#allocation7 + $0x248] sm:$0xff]
    %v441 = vld [vmem:[#allocation7 + $0x250] sm:$0xff]
    %v442 = vld [vmem:[#allocation7 + $0x258] sm:$0xff]
    %v443 = vld [vmem:[#allocation7 + $0x260] sm:$0xff]
    %v444 = vld [vmem:[#allocation7 + $0x268] sm:$0xff]
    %v445 = vld [vmem:[#allocation7 + $0x270] sm:$0xff]
    %v446 = vld [vmem:[#allocation7 + $0x278] sm:$0xff]
    %v447 = vld [vmem:[#allocation7 + $0x280] sm:$0xff]
    %v448 = vld [vmem:[#allocation7 + $0x288] sm:$0xff]
    %v449 = vld [vmem:[#allocation7 + $0x290] sm:$0xff]
    %v450 = vld [vmem:[#allocation7 + $0x298] sm:$0xff]
    %v451 = vld [vmem:[#allocation7 + $0x2a0] sm:$0xff]
    %v452 = vld [vmem:[#allocation7 + $0x2a8] sm:$0xff]
    %v453 = vld [vmem:[#allocation7 + $0x2b0] sm:$0xff]
    %v454 = vld [vmem:[#allocation7 + $0x2b8] sm:$0xff]
    %v455 = vld [vmem:[#allocation7 + $0x2c0] sm:$0xff]
    %v456 = vld [vmem:[#allocation7 + $0x2c8] sm:$0xff]
    %v457 = vld [vmem:[#allocation7 + $0x2d0] sm:$0xff]
    %v458 = vld [vmem:[#allocation7 + $0x2d8] sm:$0xff]
    %v459 = vld [vmem:[#allocation7 + $0x2e0] sm:$0xff]
    %v460 = vld [vmem:[#allocation7 + $0x2e8] sm:$0xff]
    %v461 = vld [vmem:[#allocation7 + $0x2f0] sm:$0xff]
    %v462 = vld [vmem:[#allocation7 + $0x2f8] sm:$0xff]
    %v463 = vld [vmem:[#allocation7 + $0x300] sm:$0xff]
    %v464 = vld [vmem:[#allocation7 + $0x308] sm:$0xff]
    %v465 = vld [vmem:[#allocation7 + $0x310] sm:$0xff]
    %v466 = vld [vmem:[#allocation7 + $0x318] sm:$0xff]
    %v467 = vld [vmem:[#allocation7 + $0x320] sm:$0xff]
    %v468 = vld [vmem:[#allocation7 + $0x328] sm:$0xff]
    %v469 = vld [vmem:[#allocation7 + $0x330] sm:$0xff]
    %v470 = vld [vmem:[#allocation7 + $0x338] sm:$0xff]
    %v471 = vld [vmem:[#allocation7 + $0x340] sm:$0xff]
    %v472 = vld [vmem:[#allocation7 + $0x348] sm:$0xff]
    %v473 = vld [vmem:[#allocation7 + $0x350] sm:$0xff]
    %v474 = vld [vmem:[#allocation7 + $0x358] sm:$0xff]
    %v475 = vld [vmem:[#allocation7 + $0x360] sm:$0xff]
    %v476 = vld [vmem:[#allocation7 + $0x368] sm:$0xff]
    %v477 = vld [vmem:[#allocation7 + $0x370] sm:$0xff]
    %v478 = vld [vmem:[#allocation7 + $0x378] sm:$0xff]
    %v479 = vld [vmem:[#allocation7 + $0x380] sm:$0xff]
    %v480 = vld [vmem:[#allocation7 + $0x388] sm:$0xff]
    %v481 = vld [vmem:[#allocation7 + $0x390] sm:$0xff]
    %v482 = vld [vmem:[#allocation7 + $0x398] sm:$0xff]
    %v483 = vld [vmem:[#allocation7 + $0x3a0] sm:$0xff]
    %v484 = vld [vmem:[#allocation7 + $0x3a8] sm:$0xff]
    %v485 = vld [vmem:[#allocation7 + $0x3b0] sm:$0xff]
    %v486 = vld [vmem:[#allocation7 + $0x3b8] sm:$0xff]
    %v487 = vld [vmem:[#allocation7 + $0x3c0] sm:$0xff]
    %v488 = vld [vmem:[#allocation7 + $0x3c8] sm:$0xff]
    %v489 = vld [vmem:[#allocation7 + $0x3d0] sm:$0xff]
    %v490 = vld [vmem:[#allocation7 + $0x3d8] sm:$0xff]
    %v491 = vld [vmem:[#allocation7 + $0x3e0] sm:$0xff]
    %v492 = vld [vmem:[#allocation7 + $0x3e8] sm:$0xff]
    %v493 = vld [vmem:[#allocation7 + $0x3f0] sm:$0xff]
    %v494 = vld [vmem:[#allocation7 + $0x3f8] sm:$0xff]
    %495 = vmatprep.subr.mxu0 %v368
    %496 = vmatpush1.msra.mxu0 %v367
    %497 = vmatprep.subr.mxu0 %v372
    %498 = vmatpush1.msra.mxu0 %v371
    %499 = vmatprep.subr.mxu0 %v376
    %500 = vmatpush1.msra.mxu0 %v375
    %501 = vmatprep.subr.mxu0 %v380
    %502 = vmatpush1.msra.mxu0 %v379
    %503 = vmatprep.subr.mxu0 %v384
    %504 = vmatpush1.msra.mxu0 %v383
    %505 = vmatprep.subr.mxu0 %v388
    %506 = vmatpush1.msra.mxu0 %v387
    %507 = vmatprep.subr.mxu0 %v392
    %508 = vmatpush1.msra.mxu0 %v391
    %509 = vmatprep.subr.mxu0 %v396
    %510 = vmatpush1.msra.mxu0 %v395
    %511 = vmatprep.subr.mxu0 %v400
    %512 = vmatpush1.msra.mxu0 %v399
    %513 = vmatprep.subr.mxu0 %v404
    %514 = vmatpush1.msra.mxu0 %v403
    %515 = vmatprep.subr.mxu0 %v408
    %516 = vmatpush1.msra.mxu0 %v407
    %517 = vmatprep.subr.mxu0 %v412
    %518 = vmatpush1.msra.mxu0 %v411
    %519 = vmatprep.subr.mxu0 %v416
    %520 = vmatpush1.msra.mxu0 %v415
    %521 = vmatprep.subr.mxu0 %v420
    %522 = vmatpush1.msra.mxu0 %v419
    %523 = vmatprep.subr.mxu0 %v424
    %524 = vmatpush1.msra.mxu0 %v423
    %525 = vmatprep.subr.mxu0 %v428
    %526 = vmatpush1.msra.mxu0 %v427
    %527 = vmatprep.subr.mxu0 %v432
    %528 = vmatpush1.msra.mxu0 %v431
    %529 = vmatprep.subr.mxu0 %v436
    %530 = vmatpush1.msra.mxu0 %v435
    %531 = vmatprep.subr.mxu0 %v440
    %532 = vmatpush1.msra.mxu0 %v439
    %533 = vmatprep.subr.mxu0 %v444
    %534 = vmatpush1.msra.mxu0 %v443
    %535 = vmatprep.subr.mxu0 %v448
    %536 = vmatpush1.msra.mxu0 %v447
    %537 = vmatprep.subr.mxu0 %v452
    %538 = vmatpush1.msra.mxu0 %v451
    %539 = vmatprep.subr.mxu0 %v456
    %540 = vmatpush1.msra.mxu0 %v455
    %541 = vmatprep.subr.mxu0 %v460
    %542 = vmatpush1.msra.mxu0 %v459
    %543 = vmatprep.subr.mxu0 %v464
    %544 = vmatpush1.msra.mxu0 %v463
    %545 = vmatprep.subr.mxu0 %v468
    %546 = vmatpush1.msra.mxu0 %v467
    %547 = vmatprep.subr.mxu0 %v472
    %548 = vmatpush1.msra.mxu0 %v471
    %549 = vmatprep.subr.mxu0 %v476
    %550 = vmatpush1.msra.mxu0 %v475
    %551 = vmatprep.subr.mxu0 %v480
    %552 = vmatpush1.msra.mxu0 %v479
    %553 = vmatprep.subr.mxu0 %v484
    %554 = vmatpush1.msra.mxu0 %v483
    %555 = vmatprep.subr.mxu0 %v488
    %556 = vmatpush1.msra.mxu0 %v487
    %557 = vmatprep.subr.mxu0 %v492
    %558 = vmatpush1.msra.mxu0 %v491
    %559 = vmatprep.mubr.f32.mxu0 %v366
    %560 = vmatmul.mubr.f32.gmra.mrb[0].mxu0 %v365
    %v561 = vpop.f32.mrb[0].mxu0
    %v562 = vadd.f32 0.0, %v561
    %v563 = vpop.f32.mrb[0].mxu0
    %v564 = vadd.f32 0.0, %v563
    %565 = vdwg.mxu0
    %566 = vmatprep.subr.mxu0 %v370
    %567 = vmatpush1.msra.mxu0 %v369
    %568 = vmatprep.subr.mxu0 %v374
    %569 = vmatpush1.msra.mxu0 %v373
    %570 = vmatprep.subr.mxu0 %v378
    %571 = vmatpush1.msra.mxu0 %v377
    %572 = vmatprep.subr.mxu0 %v382
    %573 = vmatpush1.msra.mxu0 %v381
    %574 = vmatprep.subr.mxu0 %v386
    %575 = vmatpush1.msra.mxu0 %v385
    %576 = vmatprep.subr.mxu0 %v390
    %577 = vmatpush1.msra.mxu0 %v389
    %578 = vmatprep.subr.mxu0 %v394
    %579 = vmatpush1.msra.mxu0 %v393
    %580 = vmatprep.subr.mxu0 %v398
    %581 = vmatpush1.msra.mxu0 %v397
    %582 = vmatprep.subr.mxu0 %v402
    %583 = vmatpush1.msra.mxu0 %v401
    %584 = vmatprep.subr.mxu0 %v406
    %585 = vmatpush1.msra.mxu0 %v405
    %586 = vmatprep.subr.mxu0 %v410
    %587 = vmatpush1.msra.mxu0 %v409
    %588 = vmatprep.subr.mxu0 %v414
    %589 = vmatpush1.msra.mxu0 %v413
    %590 = vmatprep.subr.mxu0 %v418
    %591 = vmatpush1.msra.mxu0 %v417
    %592 = vmatprep.subr.mxu0 %v422
    %593 = vmatpush1.msra.mxu0 %v421
    %594 = vmatprep.subr.mxu0 %v426
    %595 = vmatpush1.msra.mxu0 %v425
    %596 = vmatprep.subr.mxu0 %v430
    %597 = vmatpush1.msra.mxu0 %v429
    %598 = vmatprep.subr.mxu0 %v434
    %599 = vmatpush1.msra.mxu0 %v433
    %600 = vmatprep.subr.mxu0 %v438
    %601 = vmatpush1.msra.mxu0 %v437
    %602 = vmatprep.subr.mxu0 %v442
    %603 = vmatpush1.msra.mxu0 %v441
    %604 = vmatprep.subr.mxu0 %v446
    %605 = vmatpush1.msra.mxu0 %v445
    %606 = vmatprep.subr.mxu0 %v450
    %607 = vmatpush1.msra.mxu0 %v449
    %608 = vmatprep.subr.mxu0 %v454
    %609 = vmatpush1.msra.mxu0 %v453
    %610 = vmatprep.subr.mxu0 %v458
    %611 = vmatpush1.msra.mxu0 %v457
    %612 = vmatprep.subr.mxu0 %v462
    %613 = vmatpush1.msra.mxu0 %v461
    %614 = vmatprep.subr.mxu0 %v466
    %615 = vmatpush1.msra.mxu0 %v465
    %616 = vmatprep.subr.mxu0 %v470
    %617 = vmatpush1.msra.mxu0 %v469
    %618 = vmatprep.subr.mxu0 %v474
    %619 = vmatpush1.msra.mxu0 %v473
    %620 = vmatprep.subr.mxu0 %v478
    %621 = vmatpush1.msra.mxu0 %v477
    %622 = vmatprep.subr.mxu0 %v482
    %623 = vmatpush1.msra.mxu0 %v481
    %624 = vmatprep.subr.mxu0 %v486
    %625 = vmatpush1.msra.mxu0 %v485
    %626 = vmatprep.subr.mxu0 %v490
    %627 = vmatpush1.msra.mxu0 %v489
    %628 = vmatprep.subr.mxu0 %v494
    %629 = vmatpush1.msra.mxu0 %v493
    %630 = vmatprep.mubr.f32.mxu0 %v366
    %631 = vmatmul.mubr.f32.gmra.mrb[0].mxu0 %v365
    %v632 = vpop.f32.mrb[0].mxu0
    %v633 = vadd.f32 0.0, %v632
    %v634 = vpop.f32.mrb[0].mxu0
    %v635 = vadd.f32 0.0, %v634
    %636 = vdwg.mxu0
    %v637 = vmax.f32 %v562, 0.0
    %v638 = vmax.f32 %v564, 0.0
    %v639 = vmax.f32 %v633, 0.0
    %v640 = vmax.f32 %v635, 0.0
    %v641 = vld [vmem:[#allocation8] sm:$0xff]
    %v642 = vld [vmem:[#allocation8 + $0x8] sm:$0xff]
    %v643 = vld [vmem:[#allocation8 + $0x10] sm:$0xff]
    %v644 = vld [vmem:[#allocation8 + $0x18] sm:$0xff]
    %v645 = vld [vmem:[#allocation8 + $0x20] sm:$0xff]
    %v646 = vld [vmem:[#allocation8 + $0x28] sm:$0xff]
    %v647 = vld [vmem:[#allocation8 + $0x30] sm:$0xff]
    %v648 = vld [vmem:[#allocation8 + $0x38] sm:$0xff]
    %v649 = vld [vmem:[#allocation8 + $0x40] sm:$0xff]
    %v650 = vld [vmem:[#allocation8 + $0x48] sm:$0xff]
    %v651 = vld [vmem:[#allocation8 + $0x50] sm:$0xff]
    %v652 = vld [vmem:[#allocation8 + $0x58] sm:$0xff]
    %v653 = vld [vmem:[#allocation8 + $0x60] sm:$0xff]
    %v654 = vld [vmem:[#allocation8 + $0x68] sm:$0xff]
    %v655 = vld [vmem:[#allocation8 + $0x70] sm:$0xff]
    %v656 = vld [vmem:[#allocation8 + $0x78] sm:$0xff]
    %v657 = vld [vmem:[#allocation8 + $0x80] sm:$0xff]
    %v658 = vld [vmem:[#allocation8 + $0x88] sm:$0xff]
    %v659 = vld [vmem:[#allocation8 + $0x90] sm:$0xff]
    %v660 = vld [vmem:[#allocation8 + $0x98] sm:$0xff]
    %v661 = vld [vmem:[#allocation8 + $0xa0] sm:$0xff]
    %v662 = vld [vmem:[#allocation8 + $0xa8] sm:$0xff]
    %v663 = vld [vmem:[#allocation8 + $0xb0] sm:$0xff]
    %v664 = vld [vmem:[#allocation8 + $0xb8] sm:$0xff]
    %v665 = vld [vmem:[#allocation8 + $0xc0] sm:$0xff]
    %v666 = vld [vmem:[#allocation8 + $0xc8] sm:$0xff]
    %v667 = vld [vmem:[#allocation8 + $0xd0] sm:$0xff]
    %v668 = vld [vmem:[#allocation8 + $0xd8] sm:$0xff]
    %v669 = vld [vmem:[#allocation8 + $0xe0] sm:$0xff]
    %v670 = vld [vmem:[#allocation8 + $0xe8] sm:$0xff]
    %v671 = vld [vmem:[#allocation8 + $0xf0] sm:$0xff]
    %v672 = vld [vmem:[#allocation8 + $0xf8] sm:$0xff]
    %v673 = vld [vmem:[#allocation8 + $0x100] sm:$0xff]
    %v674 = vld [vmem:[#allocation8 + $0x108] sm:$0xff]
    %v675 = vld [vmem:[#allocation8 + $0x110] sm:$0xff]
    %v676 = vld [vmem:[#allocation8 + $0x118] sm:$0xff]
    %v677 = vld [vmem:[#allocation8 + $0x120] sm:$0xff]
    %v678 = vld [vmem:[#allocation8 + $0x128] sm:$0xff]
    %v679 = vld [vmem:[#allocation8 + $0x130] sm:$0xff]
    %v680 = vld [vmem:[#allocation8 + $0x138] sm:$0xff]
    %v681 = vld [vmem:[#allocation8 + $0x140] sm:$0xff]
    %v682 = vld [vmem:[#allocation8 + $0x148] sm:$0xff]
    %v683 = vld [vmem:[#allocation8 + $0x150] sm:$0xff]
    %v684 = vld [vmem:[#allocation8 + $0x158] sm:$0xff]
    %v685 = vld [vmem:[#allocation8 + $0x160] sm:$0xff]
    %v686 = vld [vmem:[#allocation8 + $0x168] sm:$0xff]
    %v687 = vld [vmem:[#allocation8 + $0x170] sm:$0xff]
    %v688 = vld [vmem:[#allocation8 + $0x178] sm:$0xff]
    %v689 = vld [vmem:[#allocation8 + $0x180] sm:$0xff]
    %v690 = vld [vmem:[#allocation8 + $0x188] sm:$0xff]
    %v691 = vld [vmem:[#allocation8 + $0x190] sm:$0xff]
    %v692 = vld [vmem:[#allocation8 + $0x198] sm:$0xff]
    %v693 = vld [vmem:[#allocation8 + $0x1a0] sm:$0xff]
    %v694 = vld [vmem:[#allocation8 + $0x1a8] sm:$0xff]
    %v695 = vld [vmem:[#allocation8 + $0x1b0] sm:$0xff]
    %v696 = vld [vmem:[#allocation8 + $0x1b8] sm:$0xff]
    %v697 = vld [vmem:[#allocation8 + $0x1c0] sm:$0xff]
    %v698 = vld [vmem:[#allocation8 + $0x1c8] sm:$0xff]
    %v699 = vld [vmem:[#allocation8 + $0x1d0] sm:$0xff]
    %v700 = vld [vmem:[#allocation8 + $0x1d8] sm:$0xff]
    %v701 = vld [vmem:[#allocation8 + $0x1e0] sm:$0xff]
    %v702 = vld [vmem:[#allocation8 + $0x1e8] sm:$0xff]
    %v703 = vld [vmem:[#allocation8 + $0x1f0] sm:$0xff]
    %v704 = vld [vmem:[#allocation8 + $0x1f8] sm:$0xff]
    %v705 = vld [vmem:[#allocation8 + $0x200] sm:$0xff]
    %v706 = vld [vmem:[#allocation8 + $0x208] sm:$0xff]
    %v707 = vld [vmem:[#allocation8 + $0x210] sm:$0xff]
    %v708 = vld [vmem:[#allocation8 + $0x218] sm:$0xff]
    %v709 = vld [vmem:[#allocation8 + $0x220] sm:$0xff]
    %v710 = vld [vmem:[#allocation8 + $0x228] sm:$0xff]
    %v711 = vld [vmem:[#allocation8 + $0x230] sm:$0xff]
    %v712 = vld [vmem:[#allocation8 + $0x238] sm:$0xff]
    %v713 = vld [vmem:[#allocation8 + $0x240] sm:$0xff]
    %v714 = vld [vmem:[#allocation8 + $0x248] sm:$0xff]
    %v715 = vld [vmem:[#allocation8 + $0x250] sm:$0xff]
    %v716 = vld [vmem:[#allocation8 + $0x258] sm:$0xff]
    %v717 = vld [vmem:[#allocation8 + $0x260] sm:$0xff]
    %v718 = vld [vmem:[#allocation8 + $0x268] sm:$0xff]
    %v719 = vld [vmem:[#allocation8 + $0x270] sm:$0xff]
    %v720 = vld [vmem:[#allocation8 + $0x278] sm:$0xff]
    %v721 = vld [vmem:[#allocation8 + $0x280] sm:$0xff]
    %v722 = vld [vmem:[#allocation8 + $0x288] sm:$0xff]
    %v723 = vld [vmem:[#allocation8 + $0x290] sm:$0xff]
    %v724 = vld [vmem:[#allocation8 + $0x298] sm:$0xff]
    %v725 = vld [vmem:[#allocation8 + $0x2a0] sm:$0xff]
    %v726 = vld [vmem:[#allocation8 + $0x2a8] sm:$0xff]
    %v727 = vld [vmem:[#allocation8 + $0x2b0] sm:$0xff]
    %v728 = vld [vmem:[#allocation8 + $0x2b8] sm:$0xff]
    %v729 = vld [vmem:[#allocation8 + $0x2c0] sm:$0xff]
    %v730 = vld [vmem:[#allocation8 + $0x2c8] sm:$0xff]
    %v731 = vld [vmem:[#allocation8 + $0x2d0] sm:$0xff]
    %v732 = vld [vmem:[#allocation8 + $0x2d8] sm:$0xff]
    %v733 = vld [vmem:[#allocation8 + $0x2e0] sm:$0xff]
    %v734 = vld [vmem:[#allocation8 + $0x2e8] sm:$0xff]
    %v735 = vld [vmem:[#allocation8 + $0x2f0] sm:$0xff]
    %v736 = vld [vmem:[#allocation8 + $0x2f8] sm:$0xff]
    %v737 = vld [vmem:[#allocation8 + $0x300] sm:$0xff]
    %v738 = vld [vmem:[#allocation8 + $0x308] sm:$0xff]
    %v739 = vld [vmem:[#allocation8 + $0x310] sm:$0xff]
    %v740 = vld [vmem:[#allocation8 + $0x318] sm:$0xff]
    %v741 = vld [vmem:[#allocation8 + $0x320] sm:$0xff]
    %v742 = vld [vmem:[#allocation8 + $0x328] sm:$0xff]
    %v743 = vld [vmem:[#allocation8 + $0x330] sm:$0xff]
    %v744 = vld [vmem:[#allocation8 + $0x338] sm:$0xff]
    %v745 = vld [vmem:[#allocation8 + $0x340] sm:$0xff]
    %v746 = vld [vmem:[#allocation8 + $0x348] sm:$0xff]
    %v747 = vld [vmem:[#allocation8 + $0x350] sm:$0xff]
    %v748 = vld [vmem:[#allocation8 + $0x358] sm:$0xff]
    %v749 = vld [vmem:[#allocation8 + $0x360] sm:$0xff]
    %v750 = vld [vmem:[#allocation8 + $0x368] sm:$0xff]
    %v751 = vld [vmem:[#allocation8 + $0x370] sm:$0xff]
    %v752 = vld [vmem:[#allocation8 + $0x378] sm:$0xff]
    %v753 = vld [vmem:[#allocation8 + $0x380] sm:$0xff]
    %v754 = vld [vmem:[#allocation8 + $0x388] sm:$0xff]
    %v755 = vld [vmem:[#allocation8 + $0x390] sm:$0xff]
    %v756 = vld [vmem:[#allocation8 + $0x398] sm:$0xff]
    %v757 = vld [vmem:[#allocation8 + $0x3a0] sm:$0xff]
    %v758 = vld [vmem:[#allocation8 + $0x3a8] sm:$0xff]
    %v759 = vld [vmem:[#allocation8 + $0x3b0] sm:$0xff]
    %v760 = vld [vmem:[#allocation8 + $0x3b8] sm:$0xff]
    %v761 = vld [vmem:[#allocation8 + $0x3c0] sm:$0xff]
    %v762 = vld [vmem:[#allocation8 + $0x3c8] sm:$0xff]
    %v763 = vld [vmem:[#allocation8 + $0x3d0] sm:$0xff]
    %v764 = vld [vmem:[#allocation8 + $0x3d8] sm:$0xff]
    %v765 = vld [vmem:[#allocation8 + $0x3e0] sm:$0xff]
    %v766 = vld [vmem:[#allocation8 + $0x3e8] sm:$0xff]
    %v767 = vld [vmem:[#allocation8 + $0x3f0] sm:$0xff]
    %v768 = vld [vmem:[#allocation8 + $0x3f8] sm:$0xff]
    %769 = vmatprep.subr.mxu0 %v642
    %770 = vmatpush1.msra.mxu0 %v641
    %771 = vmatprep.subr.mxu0 %v644
    %772 = vmatpush1.msra.mxu0 %v643
    %773 = vmatprep.subr.mxu0 %v646
    %774 = vmatpush1.msra.mxu0 %v645
    %775 = vmatprep.subr.mxu0 %v648
    %776 = vmatpush1.msra.mxu0 %v647
    %777 = vmatprep.subr.mxu0 %v650
    %778 = vmatpush1.msra.mxu0 %v649
    %779 = vmatprep.subr.mxu0 %v652
    %780 = vmatpush1.msra.mxu0 %v651
    %781 = vmatprep.subr.mxu0 %v654
    %782 = vmatpush1.msra.mxu0 %v653
    %783 = vmatprep.subr.mxu0 %v656
    %784 = vmatpush1.msra.mxu0 %v655
    %785 = vmatprep.subr.mxu0 %v658
    %786 = vmatpush1.msra.mxu0 %v657
    %787 = vmatprep.subr.mxu0 %v660
    %788 = vmatpush1.msra.mxu0 %v659
    %789 = vmatprep.subr.mxu0 %v662
    %790 = vmatpush1.msra.mxu0 %v661
    %791 = vmatprep.subr.mxu0 %v664
    %792 = vmatpush1.msra.mxu0 %v663
    %793 = vmatprep.subr.mxu0 %v666
    %794 = vmatpush1.msra.mxu0 %v665
    %795 = vmatprep.subr.mxu0 %v668
    %796 = vmatpush1.msra.mxu0 %v667
    %797 = vmatprep.subr.mxu0 %v670
    %798 = vmatpush1.msra.mxu0 %v669
    %799 = vmatprep.subr.mxu0 %v672
    %800 = vmatpush1.msra.mxu0 %v671
    %801 = vmatprep.subr.mxu0 %v674
    %802 = vmatpush1.msra.mxu0 %v673
    %803 = vmatprep.subr.mxu0 %v676
    %804 = vmatpush1.msra.mxu0 %v675
    %805 = vmatprep.subr.mxu0 %v678
    %806 = vmatpush1.msra.mxu0 %v677
    %807 = vmatprep.subr.mxu0 %v680
    %808 = vmatpush1.msra.mxu0 %v679
    %809 = vmatprep.subr.mxu0 %v682
    %810 = vmatpush1.msra.mxu0 %v681
    %811 = vmatprep.subr.mxu0 %v684
    %812 = vmatpush1.msra.mxu0 %v683
    %813 = vmatprep.subr.mxu0 %v686
    %814 = vmatpush1.msra.mxu0 %v685
    %815 = vmatprep.subr.mxu0 %v688
    %816 = vmatpush1.msra.mxu0 %v687
    %817 = vmatprep.subr.mxu0 %v690
    %818 = vmatpush1.msra.mxu0 %v689
    %819 = vmatprep.subr.mxu0 %v692
    %820 = vmatpush1.msra.mxu0 %v691
    %821 = vmatprep.subr.mxu0 %v694
    %822 = vmatpush1.msra.mxu0 %v693
    %823 = vmatprep.subr.mxu0 %v696
    %824 = vmatpush1.msra.mxu0 %v695
    %825 = vmatprep.subr.mxu0 %v698
    %826 = vmatpush1.msra.mxu0 %v697
    %827 = vmatprep.subr.mxu0 %v700
    %828 = vmatpush1.msra.mxu0 %v699
    %829 = vmatprep.subr.mxu0 %v702
    %830 = vmatpush1.msra.mxu0 %v701
    %831 = vmatprep.subr.mxu0 %v704
    %832 = vmatpush1.msra.mxu0 %v703
    %833 = vmatprep.mubr.f32.mxu0 %v638
    %834 = vmatmul.mubr.f32.gmra.mrb[0].mxu0 %v637
    %v835 = vpop.f32.mrb[0].mxu0
    %v836 = vadd.f32 0.0, %v835
    %v837 = vpop.f32.mrb[0].mxu0
    %v838 = vadd.f32 0.0, %v837
    %839 = vdwg.mxu0
    %840 = vmatprep.subr.mxu0 %v706
    %841 = vmatpush1.msra.mxu0 %v705
    %842 = vmatprep.subr.mxu0 %v708
    %843 = vmatpush1.msra.mxu0 %v707
    %844 = vmatprep.subr.mxu0 %v710
    %845 = vmatpush1.msra.mxu0 %v709
    %846 = vmatprep.subr.mxu0 %v712
    %847 = vmatpush1.msra.mxu0 %v711
    %848 = vmatprep.subr.mxu0 %v714
    %849 = vmatpush1.msra.mxu0 %v713
    %850 = vmatprep.subr.mxu0 %v716
    %851 = vmatpush1.msra.mxu0 %v715
    %852 = vmatprep.subr.mxu0 %v718
    %853 = vmatpush1.msra.mxu0 %v717
    %854 = vmatprep.subr.mxu0 %v720
    %855 = vmatpush1.msra.mxu0 %v719
    %856 = vmatprep.subr.mxu0 %v722
    %857 = vmatpush1.msra.mxu0 %v721
    %858 = vmatprep.subr.mxu0 %v724
    %859 = vmatpush1.msra.mxu0 %v723
    %860 = vmatprep.subr.mxu0 %v726
    %861 = vmatpush1.msra.mxu0 %v725
    %862 = vmatprep.subr.mxu0 %v728
    %863 = vmatpush1.msra.mxu0 %v727
    %864 = vmatprep.subr.mxu0 %v730
    %865 = vmatpush1.msra.mxu0 %v729
    %866 = vmatprep.subr.mxu0 %v732
    %867 = vmatpush1.msra.mxu0 %v731
    %868 = vmatprep.subr.mxu0 %v734
    %869 = vmatpush1.msra.mxu0 %v733
    %870 = vmatprep.subr.mxu0 %v736
    %871 = vmatpush1.msra.mxu0 %v735
    %872 = vmatprep.subr.mxu0 %v738
    %873 = vmatpush1.msra.mxu0 %v737
    %874 = vmatprep.subr.mxu0 %v740
    %875 = vmatpush1.msra.mxu0 %v739
    %876 = vmatprep.subr.mxu0 %v742
    %877 = vmatpush1.msra.mxu0 %v741
    %878 = vmatprep.subr.mxu0 %v744
    %879 = vmatpush1.msra.mxu0 %v743
    %880 = vmatprep.subr.mxu0 %v746
    %881 = vmatpush1.msra.mxu0 %v745
    %882 = vmatprep.subr.mxu0 %v748
    %883 = vmatpush1.msra.mxu0 %v747
    %884 = vmatprep.subr.mxu0 %v750
    %885 = vmatpush1.msra.mxu0 %v749
    %886 = vmatprep.subr.mxu0 %v752
    %887 = vmatpush1.msra.mxu0 %v751
    %888 = vmatprep.subr.mxu0 %v754
    %889 = vmatpush1.msra.mxu0 %v753
    %890 = vmatprep.subr.mxu0 %v756
    %891 = vmatpush1.msra.mxu0 %v755
    %892 = vmatprep.subr.mxu0 %v758
    %893 = vmatpush1.msra.mxu0 %v757
    %894 = vmatprep.subr.mxu0 %v760
    %895 = vmatpush1.msra.mxu0 %v759
    %896 = vmatprep.subr.mxu0 %v762
    %897 = vmatpush1.msra.mxu0 %v761
    %898 = vmatprep.subr.mxu0 %v764
    %899 = vmatpush1.msra.mxu0 %v763
    %900 = vmatprep.subr.mxu0 %v766
    %901 = vmatpush1.msra.mxu0 %v765
    %902 = vmatprep.subr.mxu0 %v768
    %903 = vmatpush1.msra.mxu0 %v767
    %904 = vmatprep.mubr.f32.mxu0 %v640
    %905 = vmatmul.mubr.f32.gmra.mrb[0].mxu0 %v639
    %v906 = vpop.f32.mrb[0].mxu0
    %v907 = vadd.f32 %v836, %v906
    %v908 = vpop.f32.mrb[0].mxu0
    %v909 = vadd.f32 %v838, %v908
    %910 = vdwg.mxu0
    %v911 = vmax.f32 %v907, 0.0
    %v912 = vmax.f32 %v909, 0.0
    %v913 = vld [vmem:[#allocation10] sm:$0xff]
    %v914 = vld [vmem:[#allocation10 + $0x8] sm:$0xff]
    %v915 = vld [vmem:[#allocation10 + $0x10] sm:$0xff]
    %v916 = vld [vmem:[#allocation10 + $0x18] sm:$0xff]
    %v917 = vld [vmem:[#allocation10 + $0x20] sm:$0xff]
    %v918 = vld [vmem:[#allocation10 + $0x28] sm:$0xff]
    %v919 = vld [vmem:[#allocation10 + $0x30] sm:$0xff]
    %v920 = vld [vmem:[#allocation10 + $0x38] sm:$0xff]
    %v921 = vld [vmem:[#allocation10 + $0x40] sm:$0xff]
    %v922 = vld [vmem:[#allocation10 + $0x48] sm:$0xff]
    %v923 = vld [vmem:[#allocation10 + $0x50] sm:$0xff]
    %v924 = vld [vmem:[#allocation10 + $0x58] sm:$0xff]
    %v925 = vld [vmem:[#allocation10 + $0x60] sm:$0xff]
    %v926 = vld [vmem:[#allocation10 + $0x68] sm:$0xff]
    %v927 = vld [vmem:[#allocation10 + $0x70] sm:$0xff]
    %v928 = vld [vmem:[#allocation10 + $0x78] sm:$0xff]
    %v929 = vld [vmem:[#allocation10 + $0x80] sm:$0xff]
    %v930 = vld [vmem:[#allocation10 + $0x88] sm:$0xff]
    %v931 = vld [vmem:[#allocation10 + $0x90] sm:$0xff]
    %v932 = vld [vmem:[#allocation10 + $0x98] sm:$0xff]
    %v933 = vld [vmem:[#allocation10 + $0xa0] sm:$0xff]
    %v934 = vld [vmem:[#allocation10 + $0xa8] sm:$0xff]
    %v935 = vld [vmem:[#allocation10 + $0xb0] sm:$0xff]
    %v936 = vld [vmem:[#allocation10 + $0xb8] sm:$0xff]
    %v937 = vld [vmem:[#allocation10 + $0xc0] sm:$0xff]
    %v938 = vld [vmem:[#allocation10 + $0xc8] sm:$0xff]
    %v939 = vld [vmem:[#allocation10 + $0xd0] sm:$0xff]
    %v940 = vld [vmem:[#allocation10 + $0xd8] sm:$0xff]
    %v941 = vld [vmem:[#allocation10 + $0xe0] sm:$0xff]
    %v942 = vld [vmem:[#allocation10 + $0xe8] sm:$0xff]
    %v943 = vld [vmem:[#allocation10 + $0xf0] sm:$0xff]
    %v944 = vld [vmem:[#allocation10 + $0xf8] sm:$0xff]
    %945 = vmatprep.subr.mxu0 0.0
    %946 = vmatpush1.msra.mxu0 %v913
    %947 = vmatprep.subr.mxu0 0.0
    %948 = vmatpush1.msra.mxu0 %v914
    %949 = vmatprep.subr.mxu0 0.0
    %950 = vmatpush1.msra.mxu0 %v915
    %951 = vmatprep.subr.mxu0 0.0
    %952 = vmatpush1.msra.mxu0 %v916
    %953 = vmatprep.subr.mxu0 0.0
    %954 = vmatpush1.msra.mxu0 %v917
    %955 = vmatprep.subr.mxu0 0.0
    %956 = vmatpush1.msra.mxu0 %v918
    %957 = vmatprep.subr.mxu0 0.0
    %958 = vmatpush1.msra.mxu0 %v919
    %959 = vmatprep.subr.mxu0 0.0
    %960 = vmatpush1.msra.mxu0 %v920
    %961 = vmatprep.subr.mxu0 0.0
    %962 = vmatpush1.msra.mxu0 %v921
    %963 = vmatprep.subr.mxu0 0.0
    %964 = vmatpush1.msra.mxu0 %v922
    %965 = vmatprep.subr.mxu0 0.0
    %966 = vmatpush1.msra.mxu0 %v923
    %967 = vmatprep.subr.mxu0 0.0
    %968 = vmatpush1.msra.mxu0 %v924
    %969 = vmatprep.subr.mxu0 0.0
    %970 = vmatpush1.msra.mxu0 %v925
    %971 = vmatprep.subr.mxu0 0.0
    %972 = vmatpush1.msra.mxu0 %v926
    %973 = vmatprep.subr.mxu0 0.0
    %974 = vmatpush1.msra.mxu0 %v927
    %975 = vmatprep.subr.mxu0 0.0
    %976 = vmatpush1.msra.mxu0 %v928
    %977 = vmatprep.subr.mxu0 0.0
    %978 = vmatpush1.msra.mxu0 %v929
    %979 = vmatprep.subr.mxu0 0.0
    %980 = vmatpush1.msra.mxu0 %v930
    %981 = vmatprep.subr.mxu0 0.0
    %982 = vmatpush1.msra.mxu0 %v931
    %983 = vmatprep.subr.mxu0 0.0
    %984 = vmatpush1.msra.mxu0 %v932
    %985 = vmatprep.subr.mxu0 0.0
    %986 = vmatpush1.msra.mxu0 %v933
    %987 = vmatprep.subr.mxu0 0.0
    %988 = vmatpush1.msra.mxu0 %v934
    %989 = vmatprep.subr.mxu0 0.0
    %990 = vmatpush1.msra.mxu0 %v935
    %991 = vmatprep.subr.mxu0 0.0
    %992 = vmatpush1.msra.mxu0 %v936
    %993 = vmatprep.subr.mxu0 0.0
    %994 = vmatpush1.msra.mxu0 %v937
    %995 = vmatprep.subr.mxu0 0.0
    %996 = vmatpush1.msra.mxu0 %v938
    %997 = vmatprep.subr.mxu0 0.0
    %998 = vmatpush1.msra.mxu0 %v939
    %999 = vmatprep.subr.mxu0 0.0
    %1000 = vmatpush1.msra.mxu0 %v940
    %1001 = vmatprep.subr.mxu0 0.0
    %1002 = vmatpush1.msra.mxu0 %v941
    %1003 = vmatprep.subr.mxu0 0.0
    %1004 = vmatpush1.msra.mxu0 %v942
    %1005 = vmatprep.subr.mxu0 0.0
    %1006 = vmatpush1.msra.mxu0 %v943
    %1007 = vmatprep.subr.mxu0 0.0
    %1008 = vmatpush1.msra.mxu0 %v944
    %1009 = vmatprep.mubr.f32.mxu0 %v912
    %1010 = vmatmul.mubr.f32.gmra.mrb[0].mxu0 %v911
    %v1011 = vpop.f32.mrb[0].mxu0
    %v1012 = vadd.f32 0.0, %v1011
    %v1013 = vpop.f32.mrb[0].mxu0
    %1014 = vdwg.mxu0
    %1015 = vst [vmem:[#allocation11] sm:$0xf] %v1012
    // Predicated region
    $region42: #{tpu_custom_call.1} parent=1 // pred_check
      _
    $region43: #{tpu_custom_call.1} parent=1 // pred_check_branch
      %1017 = sbr.rel (0) target = $region45
    $region44: #{tpu_custom_call.1} parent=1 // pred_region
      %s1019 = ssub.s32 64, 64
      %1020 = vsyncadd [#allocation4], %s1019
      %s1022 = sshll.u32 [#allocation11], 4
      %s1023 = int_to_ptr.vmem [resolvable:$true] %s1022
      %1025 = dma.vmem_to_hbm [thread:$0]  %s1023, 64, %s5, [#allocation4]
    $region45: #{tpu_custom_call.1} parent=1 // pred_fallthru
      _
    // Predicated region
    $region46: #{tpu_custom_call.1} parent=1 // pred_check
      _
    $region47: #{tpu_custom_call.1} parent=1 // pred_check_branch
      %1027 = sbr.rel (0) target = $region49
    $region48: #{tpu_custom_call.1} parent=1 // pred_region
      %1028 = dma.done [#allocation4], 64
    $region49: #{tpu_custom_call.1} parent=1 // pred_fallthru
      _
    %1029 = vsyncpa [#allocation3], 1
    %1030 = vsyncpa [#allocation6], 1
    %1031 = vsyncpa [#allocation9], 1
    %1032 = vsyncpa [#allocation4], 1

</llo_original>
